<compile_context>
chip_gen: v7x
topology: tpu7x:2x2x1
jax: 0.10.0
libtpu: 0.0.40
codegen_flags: <defaults>
</compile_context>

<pallas_src>
import functools
import math

import jax
import jax.numpy as jnp
from jax.experimental import pallas as pl
from jax.experimental.pallas import tpu as pltpu


def _oracle_loss_kernel(logits_ref, tgt_ref, w_ref, loss_ref, wsum_ref,
                        acc_num_ref, acc_den_ref, *,
                        hw, pix_per_block, tiles_per_chunk, num_classes):
    x = logits_ref[...].astype(jnp.float32)    # (C, *P) logits, widened once
    t = tgt_ref[...]                           # (1, *P) int32 targets
    w = w_ref[...].astype(jnp.float32)         # (C, 1[, 1]) class weights

    # Flat pixel index of each element of this block, from the grid position
    # (no HBM `valid` array).  Only the true last block can be partial.
    g = pl.program_id(1) * tiles_per_chunk + pl.program_id(2)
    idx = jax.lax.broadcasted_iota(jnp.int32, t.shape, t.ndim - 1)
    stride = t.shape[-1]
    for ax in range(t.ndim - 2, 0, -1):
        idx = idx + jax.lax.broadcasted_iota(jnp.int32, t.shape, ax) * stride
        stride *= t.shape[ax]
    valid = (g * pix_per_block + idx) < hw     # (1, *P) bool

    cids = jax.lax.broadcasted_iota(jnp.int32, x.shape, 0)       # (C, *P)

    # argmax over channels (first maximal index -> matches torch / jnp.argmax)
    xmax = jnp.max(x, axis=0, keepdims=True)                     # (1, *P)
    pred = jnp.min(jnp.where(x == xmax, cids, num_classes),
                   axis=0, keepdims=True)                        # (1, *P)
    oracle = pred == t                                           # (1, *P)

    # log_softmax of the oracle-masked logits, evaluated at the target only:
    #   oracle==1 -> masked == x -> logp_t = x_t - xmax - log(sum exp(x-xmax))
    #   oracle==0 -> masked == 0 -> uniform softmax -> logp_t = -log(C)
    s = jnp.sum(jnp.exp(x - xmax), axis=0, keepdims=True)        # (1, *P)
    onehot = cids == t                                           # (C, *P)
    w_pix = jnp.sum(jnp.where(onehot, w, 0.0), axis=0, keepdims=True)
    x_t = jnp.sum(jnp.where(onehot, x, 0.0), axis=0, keepdims=True)
    logp_t = jnp.where(oracle, x_t - xmax - jnp.log(s),
                       jnp.float32(-math.log(num_classes)))      # (1, *P)

    # Quarantine stale lanes of a partial edge block with selects (not
    # multiplies), so garbage inf/NaN can never reach the accumulators.
    num = jnp.where(valid, w_pix * logp_t, 0.0)                  # (1, *P)
    den = jnp.where(valid, w_pix, 0.0)                           # (1, *P)

    @pl.when(pl.program_id(2) == 0)
    def _():
        acc_num_ref[...] = jnp.zeros_like(acc_num_ref)
        acc_den_ref[...] = jnp.zeros_like(acc_den_ref)

    # Per-lane accumulation across the tile axis (pure VPU adds).
    acc_num_ref[...] += num
    acc_den_ref[...] += den

    # Cross-lane reduce + (1,1) store once per (image, chunk) group.
    @pl.when(pl.program_id(2) == pl.num_programs(2) - 1)
    def _():
        a_num = acc_num_ref[...]
        a_den = acc_den_ref[...]
        red = tuple(range(1, a_num.ndim))
        loss_ref[...] = -jnp.sum(a_num, axis=red, keepdims=True).reshape(1, 1)
        wsum_ref[...] = jnp.sum(a_den, axis=red, keepdims=True).reshape(1, 1)


def oracle_loss_2d(outputs, targets, weight):
    """outputs: (N,C,H,W) float (any dtype), targets: (N,H,W) int, weight: (C,)."""
    N, C, H, W = outputs.shape
    HW = H * W
    in_isz = jnp.dtype(outputs.dtype).itemsize

    targets = targets.astype(jnp.int32)
    weight = weight.astype(jnp.float32)

    # ---- generation-aware VMEM budget (v7x: 64 MiB/TC, v5e/v6e: 128 MiB) ----
    try:
        vmem_cap = int(pltpu.get_tpu_info().vmem_capacity_bytes)
    except Exception:  # fall back to the most constrained generation (v7x)
        vmem_cap = 64 * 2**20
    vmem_cap = min(max(vmem_cap, 32 * 2**20), 128 * 2**20)
    vmem_budget = int(0.65 * vmem_cap)        # headroom for Mosaic scratch

    # Live VMEM bytes per pixel of one grid step: double-buffered logits +
    # target blocks, the two f32 scratch accumulators, and a conservative
    # count of in-kernel f32 temporaries.
    bytes_per_px = (2 * C * in_isz) + (2 * 4) + (2 * 4) + (6 * C * 4) + 24
    max_px = max(128, vmem_budget // bytes_per_px)
    # Per-step logits slabs beyond ~16 MiB buy nothing extra.
    max_px = min(max_px, max(128, (16 * 2**20) // max(1, C * in_isz)))

    fast = (HW % 128) == 0
    if fast:
        # Pixels on sublanes *and* lanes; channels on a leading (non-vreg) dim.
        R = HW // 128                          # pixel rows of 128 lanes
        s_des = max(1, max_px // 128)
        if s_des >= R or R <= 8:
            S = R                              # whole image's rows in one step
        else:
            S = max(8, (s_des // 8) * 8)       # multiple of 8 sublanes
        num_tiles = int(pl.cdiv(R, S))
        pix_per_block = S * 128
        pix_shape = (1, S, 128)

        logits = outputs.reshape(N, C, R, 128)       # free reshapes only
        tgt = targets.reshape(N, 1, R, 128)
        wgt = weight.reshape(C, 1, 1)
        lg_block, tg_block, w_block = (None, C, S, 128), (None, 1, S, 128), (C, 1, 1)
    else:
        # Fallback: pixels on lanes only (still a single HBM pass, no transpose).
        t_des = max(128, (max_px // 128) * 128)
        T = HW if t_des >= HW else t_des
        num_tiles = int(pl.cdiv(HW, T))
        pix_per_block = T
        pix_shape = (1, T)

        logits = outputs.reshape(N, C, HW)
        tgt = targets.reshape(N, 1, HW)
        wgt = weight.reshape(C, 1)
        lg_block, tg_block, w_block = (None, C, T), (None, 1, T), (C, 1)

    # Pixel-chunk axis so v7x's two TensorCores stay busy for N == 1 / odd N.
    num_chunks = int(min(num_tiles, max(1, pl.cdiv(4, N))))
    tpc = int(pl.cdiv(num_tiles, num_chunks))
    num_chunks = int(pl.cdiv(num_tiles, tpc))
    last_tile = num_tiles - 1

    def pix_map(n, c, i):
        # Chunk-tail steps past the real extent re-read the last block; their
        # contribution is masked to zero in the kernel via `valid`.
        blk = jnp.minimum(c * tpc + i, last_tile)
        return (n, 0, blk, 0) if fast else (n, 0, blk)

    w_map = (lambda n, c, i: (0, 0, 0)) if fast else (lambda n, c, i: (0, 0))
    out_map = lambda n, c, i: (n, c, 0, 0)

    kernel = functools.partial(
        _oracle_loss_kernel, hw=HW, pix_per_block=pix_per_block,
        tiles_per_chunk=tpc, num_classes=C)

    vmem_limit = int(min(0.9 * vmem_cap,
                         max(32 * 2**20,
                             bytes_per_px * pix_per_block + (4 << 20))))

    P = N * HW
    cost = pl.CostEstimate(
        flops=int(P * (11 * C + 24)),
        transcendentals=int(P * (C + 1)),
        bytes_accessed=int(P * (C * in_isz + 4) + 4 * C + 8 * N * num_chunks),
    )

    loss_part, w_part = pl.pallas_call(
        kernel,
        out_shape=(jax.ShapeDtypeStruct((N, num_chunks, 1, 1), jnp.float32),
                   jax.ShapeDtypeStruct((N, num_chunks, 1, 1), jnp.float32)),
        grid=(N, num_chunks, tpc),
        in_specs=[
            pl.BlockSpec(lg_block, pix_map),   # logits (native dtype, no astype)
            pl.BlockSpec(tg_block, pix_map),   # targets
            pl.BlockSpec(w_block, w_map),      # class weights
        ],
        out_specs=(pl.BlockSpec((None, None, 1, 1), out_map),
                   pl.BlockSpec((None, None, 1, 1), out_map)),
        scratch_shapes=[pltpu.VMEM(pix_shape, jnp.float32),
                        pltpu.VMEM(pix_shape, jnp.float32)],
        compiler_params=pltpu.CompilerParams(
            dimension_semantics=("parallel", "parallel", "arbitrary"),
            vmem_limit_bytes=vmem_limit),
        cost_estimate=cost,
    )(logits, tgt, wgt)

    # Tiny per-(image, chunk) partials -> weighted mean in plain JAX.
    return jnp.sum(loss_part) / jnp.sum(w_part)


def oracle_loss_2d_ref(outputs, targets, weight):
    """Pure-JAX reference mirroring the PyTorch forward."""
    pred = jnp.argmax(outputs, axis=1)
    mask = (pred == targets).astype(outputs.dtype)
    masked = outputs * mask[:, None, :, :]
    logp = jax.nn.log_softmax(masked, axis=1)
    lp_t = jnp.take_along_axis(logp, targets[:, None, :, :], axis=1)[:, 0]
    w_t = weight[targets]
    return -(w_t * lp_t).sum() / w_t.sum()


if __name__ == "__main__":
    key = jax.random.PRNGKey(0)
    k1, k2 = jax.random.split(key)

    N, C, H, W = 2, 4, 16, 16
    outputs = jax.random.normal(k1, (N, C, H, W), dtype=jnp.float32)
    targets = jax.random.randint(k2, (N, H, W), 0, C, dtype=jnp.int32)
    # Deterministic class weights (the list passed to OracleLoss2d.__init__).
    weight = (jnp.arange(C, dtype=jnp.float32) + 1.0) / C   # [0.25, 0.5, 0.75, 1.0]

    loss = jax.block_until_ready(oracle_loss_2d(outputs, targets, weight))
    ref = jax.block_until_ready(oracle_loss_2d_ref(outputs, targets, weight))

    assert jnp.allclose(loss, ref, rtol=1e-5, atol=1e-5), (loss, ref)
    print("KERNEL_OK")
</pallas_src>

<mosaic_0001>
module attributes {stable_mosaic.version = 11 : i64} {
  func.func @_oracle_loss_kernel(%arg0: i32, %arg1: i32, %arg2: i32, %arg3: memref<1x4x2x128xf32, #tpu.memory_space<vmem>>, %arg4: memref<1x1x2x128xi32, #tpu.memory_space<vmem>>, %arg5: memref<4x1x1xf32, #tpu.memory_space<vmem>>, %arg6: memref<1x1x1x1xf32, #tpu.memory_space<vmem>>, %arg7: memref<1x1x1x1xf32, #tpu.memory_space<vmem>>, %arg8: memref<1x2x128xf32, #tpu.memory_space<vmem>>, %arg9: memref<1x2x128xf32, #tpu.memory_space<vmem>>) attributes {dimension_semantics = [#tpu.dimension_semantics<parallel>, #tpu.dimension_semantics<parallel>, #tpu.dimension_semantics<arbitrary>], iteration_bounds = array<i64: 2, 1, 1>, scalar_prefetch = 0 : i64, scratch_operands = 2 : i64, tpu.core_type = #tpu.core_type<tc>, window_params = [{transform_indices = @transform_0, window_bounds = array<i64: 1, 4, 2, 128>}, {transform_indices = @transform_1, window_bounds = array<i64: 1, 1, 2, 128>}, {pipeline_mode = #tpu.pipeline_mode<synchronous>, transform_indices = @transform_2, window_bounds = array<i64: 4, 1, 1>}, {transform_indices = @transform_3, window_bounds = array<i64: 1, 1, 1, 1>}, {transform_indices = @transform_4, window_bounds = array<i64: 1, 1, 1, 1>}]} {
    %c0 = arith.constant 0 : index
    %c0_0 = arith.constant 0 : index
    %c0_1 = arith.constant 0 : index
    %c0_2 = arith.constant 0 : index
    %0 = vector.load %arg3[%c0, %c0_0, %c0_1, %c0_2] : memref<1x4x2x128xf32, #tpu.memory_space<vmem>>, vector<1x4x2x128xf32>
    %1 = vector.shape_cast %0 : vector<1x4x2x128xf32> to vector<4x2x128xf32>
    %c0_3 = arith.constant 0 : index
    %c0_4 = arith.constant 0 : index
    %c0_5 = arith.constant 0 : index
    %c0_6 = arith.constant 0 : index
    %2 = vector.load %arg4[%c0_3, %c0_4, %c0_5, %c0_6] : memref<1x1x2x128xi32, #tpu.memory_space<vmem>>, vector<1x1x2x128xi32>
    %3 = vector.shape_cast %2 : vector<1x1x2x128xi32> to vector<1x2x128xi32>
    %c0_7 = arith.constant 0 : index
    %c0_8 = arith.constant 0 : index
    %c0_9 = arith.constant 0 : index
    %4 = vector.load %arg5[%c0_7, %c0_8, %c0_9] : memref<4x1x1xf32, #tpu.memory_space<vmem>>, vector<4x1x1xf32>
    %c1_i32 = arith.constant 1 : i32
    %5 = arith.muli %arg1, %c1_i32 : i32
    %6 = arith.addi %5, %arg2 : i32
    %7 = tpu.iota {dimensions = array<i32: 2>} : vector<1x2x128xi32>
    %8 = tpu.iota {dimensions = array<i32: 1>} : vector<1x2x128xi32>
    %c128_i32 = arith.constant 128 : i32
    %9 = vector.broadcast %c128_i32 : i32 to vector<1x2x128xi32>
    %10 = arith.muli %8, %9 : vector<1x2x128xi32>
    %11 = arith.addi %7, %10 : vector<1x2x128xi32>
    %c256_i32 = arith.constant 256 : i32
    %12 = arith.muli %6, %c256_i32 : i32
    %13 = vector.broadcast %12 : i32 to vector<1x2x128xi32>
    %14 = arith.addi %13, %11 : vector<1x2x128xi32>
    %c256_i32_10 = arith.constant 256 : i32
    %15 = vector.broadcast %c256_i32_10 : i32 to vector<1x2x128xi32>
    %16 = arith.cmpi slt, %14, %15 : vector<1x2x128xi32>
    %17 = tpu.iota {dimensions = array<i32: 0>} : vector<4x2x128xi32>
    %cst = arith.constant dense<0xFF800000> : vector<2x128xf32>
    %18 = vector.multi_reduction <maximumf>, %1, %cst [0] : vector<4x2x128xf32> to vector<2x128xf32>
    %19 = vector.shape_cast %18 : vector<2x128xf32> to vector<1x2x128xf32>
    %20 = vector.broadcast %19 : vector<1x2x128xf32> to vector<4x2x128xf32>
    %21 = arith.cmpf oeq, %1, %20 : vector<4x2x128xf32>
    %c4_i32 = arith.constant 4 : i32
    %22 = vector.broadcast %c4_i32 : i32 to vector<4x2x128xi32>
    %23 = arith.select %21, %17, %22 : vector<4x2x128xi1>, vector<4x2x128xi32>
    %cst_11 = arith.constant dense<2147483647> : vector<2x128xi32>
    %24 = vector.multi_reduction <minsi>, %23, %cst_11 [0] : vector<4x2x128xi32> to vector<2x128xi32>
    %25 = vector.shape_cast %24 : vector<2x128xi32> to vector<1x2x128xi32>
    %26 = arith.cmpi eq, %25, %3 : vector<1x2x128xi32>
    %27 = vector.broadcast %19 : vector<1x2x128xf32> to vector<4x2x128xf32>
    %28 = arith.subf %1, %27 : vector<4x2x128xf32>
    %29 = math.exp %28 : vector<4x2x128xf32>
    %cst_12 = arith.constant dense<0.000000e+00> : vector<2x128xf32>
    %30 = vector.multi_reduction <add>, %29, %cst_12 [0] : vector<4x2x128xf32> to vector<2x128xf32>
    %31 = vector.shape_cast %30 : vector<2x128xf32> to vector<1x2x128xf32>
    %32 = vector.broadcast %3 : vector<1x2x128xi32> to vector<4x2x128xi32>
    %33 = arith.cmpi eq, %17, %32 : vector<4x2x128xi32>
    %cst_13 = arith.constant 0.000000e+00 : f32
    %34 = vector.shape_cast %4 : vector<4x1x1xf32> to vector<4x1x1xf32>
    %35 = vector.broadcast %34 : vector<4x1x1xf32> to vector<4x2x128xf32>
    %36 = vector.broadcast %cst_13 : f32 to vector<4x2x128xf32>
    %37 = arith.select %33, %35, %36 : vector<4x2x128xi1>, vector<4x2x128xf32>
    %cst_14 = arith.constant dense<0.000000e+00> : vector<2x128xf32>
    %38 = vector.multi_reduction <add>, %37, %cst_14 [0] : vector<4x2x128xf32> to vector<2x128xf32>
    %39 = vector.shape_cast %38 : vector<2x128xf32> to vector<1x2x128xf32>
    %cst_15 = arith.constant 0.000000e+00 : f32
    %40 = vector.broadcast %cst_15 : f32 to vector<4x2x128xf32>
    %41 = arith.select %33, %1, %40 : vector<4x2x128xi1>, vector<4x2x128xf32>
    %cst_16 = arith.constant dense<0.000000e+00> : vector<2x128xf32>
    %42 = vector.multi_reduction <add>, %41, %cst_16 [0] : vector<4x2x128xf32> to vector<2x128xf32>
    %43 = vector.shape_cast %42 : vector<2x128xf32> to vector<1x2x128xf32>
    %44 = arith.subf %43, %19 : vector<1x2x128xf32>
    %45 = math.log %31 : vector<1x2x128xf32>
    %46 = arith.subf %44, %45 : vector<1x2x128xf32>
    %cst_17 = arith.constant -1.38629436 : f32
    %47 = vector.broadcast %cst_17 : f32 to vector<1x2x128xf32>
    %48 = arith.select %26, %46, %47 : vector<1x2x128xi1>, vector<1x2x128xf32>
    %49 = arith.mulf %39, %48 : vector<1x2x128xf32>
    %cst_18 = arith.constant 0.000000e+00 : f32
    %50 = vector.broadcast %cst_18 : f32 to vector<1x2x128xf32>
    %51 = arith.select %16, %49, %50 : vector<1x2x128xi1>, vector<1x2x128xf32>
    %cst_19 = arith.constant 0.000000e+00 : f32
    %52 = vector.broadcast %cst_19 : f32 to vector<1x2x128xf32>
    %53 = arith.select %16, %39, %52 : vector<1x2x128xi1>, vector<1x2x128xf32>
    %c0_i32 = arith.constant 0 : i32
    %54 = arith.cmpi eq, %arg2, %c0_i32 : i32
    %55 = arith.extui %54 : i1 to i32
    %c0_i32_20 = arith.constant 0 : i32
    %56 = arith.cmpi ne, %55, %c0_i32_20 : i32
    scf.if %56 {
      %cst_35 = arith.constant 0.000000e+00 : f32
      %66 = vector.broadcast %cst_35 : f32 to vector<1x2x128xf32>
      %c0_36 = arith.constant 0 : index
      %c0_37 = arith.constant 0 : index
      %c0_38 = arith.constant 0 : index
      %67 = vector.load %arg8[%c0_36, %c0_37, %c0_38] : memref<1x2x128xf32, #tpu.memory_space<vmem>>, vector<1x2x128xf32>
      tpu.vector_store %arg8[%c0_36, %c0_37, %c0_38], %66 {strides = array<i32>} : memref<1x2x128xf32, #tpu.memory_space<vmem>>, vector<1x2x128xf32>,
      %cst_39 = arith.constant 0.000000e+00 : f32
      %68 = vector.broadcast %cst_39 : f32 to vector<1x2x128xf32>
      %c0_40 = arith.constant 0 : index
      %c0_41 = arith.constant 0 : index
      %c0_42 = arith.constant 0 : index
      %69 = vector.load %arg9[%c0_40, %c0_41, %c0_42] : memref<1x2x128xf32, #tpu.memory_space<vmem>>, vector<1x2x128xf32>
      tpu.vector_store %arg9[%c0_40, %c0_41, %c0_42], %68 {strides = array<i32>} : memref<1x2x128xf32, #tpu.memory_space<vmem>>, vector<1x2x128xf32>,
    } else {
    }
    %c0_21 = arith.constant 0 : index
    %c0_22 = arith.constant 0 : index
    %c0_23 = arith.constant 0 : index
    %57 = vector.load %arg8[%c0_21, %c0_22, %c0_23] : memref<1x2x128xf32, #tpu.memory_space<vmem>>, vector<1x2x128xf32>
    %58 = arith.addf %57, %51 : vector<1x2x128xf32>
    %c0_24 = arith.constant 0 : index
    %c0_25 = arith.constant 0 : index
    %c0_26 = arith.constant 0 : index
    %59 = vector.load %arg8[%c0_24, %c0_25, %c0_26] : memref<1x2x128xf32, #tpu.memory_space<vmem>>, vector<1x2x128xf32>
    tpu.vector_store %arg8[%c0_24, %c0_25, %c0_26], %58 {strides = array<i32>} : memref<1x2x128xf32, #tpu.memory_space<vmem>>, vector<1x2x128xf32>,
    %c0_27 = arith.constant 0 : index
    %c0_28 = arith.constant 0 : index
    %c0_29 = arith.constant 0 : index
    %60 = vector.load %arg9[%c0_27, %c0_28, %c0_29] : memref<1x2x128xf32, #tpu.memory_space<vmem>>, vector<1x2x128xf32>
    %61 = arith.addf %60, %53 : vector<1x2x128xf32>
    %c0_30 = arith.constant 0 : index
    %c0_31 = arith.constant 0 : index
    %c0_32 = arith.constant 0 : index
    %62 = vector.load %arg9[%c0_30, %c0_31, %c0_32] : memref<1x2x128xf32, #tpu.memory_space<vmem>>, vector<1x2x128xf32>
    tpu.vector_store %arg9[%c0_30, %c0_31, %c0_32], %61 {strides = array<i32>} : memref<1x2x128xf32, #tpu.memory_space<vmem>>, vector<1x2x128xf32>,
    %c0_i32_33 = arith.constant 0 : i32
    %63 = arith.cmpi eq, %arg2, %c0_i32_33 : i32
    %64 = arith.extui %63 : i1 to i32
    %c0_i32_34 = arith.constant 0 : i32
    %65 = arith.cmpi ne, %64, %c0_i32_34 : i32
    scf.if %65 {
      %c0_35 = arith.constant 0 : index
      %c0_36 = arith.constant 0 : index
      %c0_37 = arith.constant 0 : index
      %66 = vector.load %arg8[%c0_35, %c0_36, %c0_37] : memref<1x2x128xf32, #tpu.memory_space<vmem>>, vector<1x2x128xf32>
      %c0_38 = arith.constant 0 : index
      %c0_39 = arith.constant 0 : index
      %c0_40 = arith.constant 0 : index
      %67 = vector.load %arg9[%c0_38, %c0_39, %c0_40] : memref<1x2x128xf32, #tpu.memory_space<vmem>>, vector<1x2x128xf32>
      %cst_41 = arith.constant dense<0.000000e+00> : vector<1xf32>
      %68 = vector.multi_reduction <add>, %66, %cst_41 [1, 2] : vector<1x2x128xf32> to vector<1xf32>
      %69 = vector.shape_cast %68 : vector<1xf32> to vector<1x1x1xf32>
      %70 = vector.shape_cast %69 : vector<1x1x1xf32> to vector<1x1xf32>
      %cst_42 = arith.constant 0.000000e+00 : f32
      %71 = vector.broadcast %cst_42 : f32 to vector<1x1xf32>
      %72 = arith.subf %71, %70 : vector<1x1xf32>
      %c0_43 = arith.constant 0 : index
      %c0_44 = arith.constant 0 : index
      %c0_45 = arith.constant 0 : index
      %c0_46 = arith.constant 0 : index
      %73 = vector.load %arg6[%c0_43, %c0_44, %c0_45, %c0_46] : memref<1x1x1x1xf32, #tpu.memory_space<vmem>>, vector<1x1x1x1xf32>
      %74 = vector.shape_cast %73 : vector<1x1x1x1xf32> to vector<1x1xf32>
      %75 = vector.shape_cast %72 : vector<1x1xf32> to vector<1x1x1x1xf32>
      tpu.vector_store %arg6[%c0_43, %c0_44, %c0_45, %c0_46], %75 {strides = array<i32>} : memref<1x1x1x1xf32, #tpu.memory_space<vmem>>, vector<1x1x1x1xf32>,
      %cst_47 = arith.constant dense<0.000000e+00> : vector<1xf32>
      %76 = vector.multi_reduction <add>, %67, %cst_47 [1, 2] : vector<1x2x128xf32> to vector<1xf32>
      %77 = vector.shape_cast %76 : vector<1xf32> to vector<1x1x1xf32>
      %78 = vector.shape_cast %77 : vector<1x1x1xf32> to vector<1x1xf32>
      %c0_48 = arith.constant 0 : index
      %c0_49 = arith.constant 0 : index
      %c0_50 = arith.constant 0 : index
      %c0_51 = arith.constant 0 : index
      %79 = vector.load %arg7[%c0_48, %c0_49, %c0_50, %c0_51] : memref<1x1x1x1xf32, #tpu.memory_space<vmem>>, vector<1x1x1x1xf32>
      %80 = vector.shape_cast %79 : vector<1x1x1x1xf32> to vector<1x1xf32>
      %81 = vector.shape_cast %78 : vector<1x1xf32> to vector<1x1x1x1xf32>
      tpu.vector_store %arg7[%c0_48, %c0_49, %c0_50, %c0_51], %81 {strides = array<i32>} : memref<1x1x1x1xf32, #tpu.memory_space<vmem>>, vector<1x1x1x1xf32>,
    } else {
    }
    return
  }
  func.func @transform_0(%arg0: i32, %arg1: i32, %arg2: i32) -> (i32, i32, i32, i32) {
    %c1_i32 = arith.constant 1 : i32
    %0 = arith.muli %arg1, %c1_i32 : i32
    %1 = arith.addi %0, %arg2 : i32
    %c0_i32 = arith.constant 0 : i32
    %2 = arith.minsi %1, %c0_i32 : i32
    %c0_i32_0 = arith.constant 0 : i32
    %c0_i32_1 = arith.constant 0 : i32
    %c0_i32_2 = arith.constant 0 : i32
    return %arg0, %c0_i32_0, %2, %c0_i32_1 : i32, i32, i32, i32
  }
  func.func @transform_1(%arg0: i32, %arg1: i32, %arg2: i32) -> (i32, i32, i32, i32) {
    %c1_i32 = arith.constant 1 : i32
    %0 = arith.muli %arg1, %c1_i32 : i32
    %1 = arith.addi %0, %arg2 : i32
    %c0_i32 = arith.constant 0 : i32
    %2 = arith.minsi %1, %c0_i32 : i32
    %c0_i32_0 = arith.constant 0 : i32
    %c0_i32_1 = arith.constant 0 : i32
    %c0_i32_2 = arith.constant 0 : i32
    return %arg0, %c0_i32_0, %2, %c0_i32_1 : i32, i32, i32, i32
  }
  func.func @transform_2(%arg0: i32, %arg1: i32, %arg2: i32) -> (i32, i32, i32) {
    %c0_i32 = arith.constant 0 : i32
    %c0_i32_0 = arith.constant 0 : i32
    %c0_i32_1 = arith.constant 0 : i32
    %c0_i32_2 = arith.constant 0 : i32
    return %c0_i32, %c0_i32_0, %c0_i32_1 : i32, i32, i32
  }
  func.func @transform_3(%arg0: i32, %arg1: i32, %arg2: i32) -> (i32, i32, i32, i32) {
    %c0_i32 = arith.constant 0 : i32
    %c0_i32_0 = arith.constant 0 : i32
    %c0_i32_1 = arith.constant 0 : i32
    return %arg0, %arg1, %c0_i32, %c0_i32_0 : i32, i32, i32, i32
  }
  func.func @transform_4(%arg0: i32, %arg1: i32, %arg2: i32) -> (i32, i32, i32, i32) {
    %c0_i32 = arith.constant 0 : i32
    %c0_i32_0 = arith.constant 0 : i32
    %c0_i32_1 = arith.constant 0 : i32
    return %arg0, %arg1, %c0_i32, %c0_i32_0 : i32, i32, i32, i32
  }
}

</mosaic_0001>

<llo_original>
// kernel: tpu_custom_call.1
$region0: #{tpu_custom_call.1}
  #allocation0 [shape = 'u32[]', space=smem, size = 0x4, offset = 0x4, fixed_abs, tag = 'smem constant byte address 0x4 - core index']
  #allocation1 [shape = 'u32[144,128]{1,0:T(1,128)}', space=vmem, size = 0x12000, scoped, tag = 'internal scratch']
  #allocation2 [shape = 'f32[1,2,128]{2,1,0:T(2,128)}', space=vmem, size = 0x400, scoped, tag = 'scratch operand']
  #allocation3 [shape = 'f32[1,2,128]{2,1,0:T(2,128)}', space=vmem, size = 0x400, scoped, tag = 'scratch operand']
  %s0 = inlined_call_operand.hbm [shape: f32[2,4,2,128], index: 0, kind: input, shape index: {}]
  %s1 = inlined_call_operand.vmem [shape: s32[2,1,2,128], index: 1, kind: input, shape index: {}]
  %s2 = inlined_call_operand.vmem [shape: f32[4,1,1], index: 2, kind: input, shape index: {}]
  %s3 = inlined_call_operand.vmem [shape: f32[2,1,1,1], index: 3, kind: output, shape index: {0}]
  %s4 = inlined_call_operand.vmem [shape: f32[2,1,1,1], index: 4, kind: output, shape index: {1}]
  %5 = xla_tuple %s3, %s4
  %s6 = sld [smem:[#allocation0]]
  $region65: #{tpu_custom_call.1} parent=0
    _
  %s8 = ssub.s32 1, %s6
  %s9 = scalar_select 0, %s8, %s6
  $region1: #{tpu_custom_call.1} parent=0
    #allocation4 [shape = 'u8[8192]{0}', space=vmem, size = 0x2000, scoped, tag = 'input window, operand 0']
    #allocation5 [shape = 's32[2]{0}', space=sflag, size = 0x8, scoped, tag = 'scoped memory for tpu_custom_call.1']
    %10 = vsyncpa [#allocation5], 0
    %s11 = scalar_lea.sflag [#allocation5], 1
    %12 = vsyncpa %s11, 0
    loop: start=0, step=1, limit=4
    $region2: #{tpu_custom_call.1} parent=1 // loop_pre_header
      _
    $region3: #{tpu_custom_call.1} parent=1 // loop_header
      %s14 = sphi 0, %s18
      %p15 = scmp.ge.s32.totalorder %s14, 4
      %s21 = sphi 0, %s40
      %s22 = sphi 0, %s36
      %s23 = sphi 0, %s32
      %s24 = sphi 0, %s21
      %s25 = sphi 0, %s22
      %s26 = sphi 0, %s23
      %s27 = sphi 0, %s24
      %s28 = sphi 0, %s25
      %s29 = sphi 0, %s26
      %s51 = sphi 0, %s53
      %s54 = sphi 0, %s51
      %s55 = sphi 0, %s54
      %s71 = sphi 0, %s55
      %s85 = sphi 0, %s87
      %s88 = sphi 0, %s85
      %s89 = sphi 0, %s88
      %s105 = sphi 0, %s89
      %s109 = sphi 0, %s109
      %s111 = sphi 0, %s109
      %s112 = sphi 0, %s111
      %s126 = sphi 0, %s112
      %s134 = sphi 0, %s136
      %s137 = sphi 0, %s134
      %s138 = sphi 0, %s137
      %s154 = sphi 0, %s138
      %s162 = sphi 0, %s164
      %s165 = sphi 0, %s162
      %s166 = sphi 0, %s165
      %s182 = sphi 0, %s166
    $region4: #{tpu_custom_call.1} parent=1 // loop_header_branch
      %17 = sbr.rel (%p15) target = $region8
    $region5: #{tpu_custom_call.1} parent=1 // loop_body
      %s19 = ssub.s32 %s14, 1
      %s20 = ssub.s32 %s14, 2
      %s30 = sadd.s32 1, %s23
      %p31 = scmp.ge.s32.totalorder %s30, 1
      %s32 = scalar_select %p31, 0, %s30
      %s33 = sadd.s32 1, %s22
      %s34 = scalar_select %p31, %s33, %s22
      %p35 = scmp.ge.s32.totalorder %s34, 1
      %s36 = scalar_select %p35, 0, %s34
      %s37 = sadd.s32 1, %s21
      %s38 = scalar_select %p35, %s37, %s21
      %p39 = scmp.ge.s32.totalorder %s38, 2
      %s40 = scalar_select %p39, 0, %s38
      %s41 = sadd.s32 %s22, %s23
      %p42 = scmp.lt.s32.totalorder %s41, 0
      %s43 = scalar_select %p42, %s41, 0
      %s44 = sadd.s32 %s36, %s32
      %p45 = scmp.lt.s32.totalorder %s44, 0
      %s46 = scalar_select %p45, %s44, 0
      %s47 = ssub.s32 %s21, %s40
      %s48 = ssub.s32 %s43, %s46
      %s49 = sor.u32 %s47, %s48
      %p50 = scmp.eq.s32.totalorder %s49, 0
      %s52 = sadd.s32 %s51, 1
      %s53 = scalar_select %p50, %s51, %s52
      %p56 = pneg %p50
      %p57 = scmp.eq.s32.totalorder %s14, 1
      %p58 = por %p56, %p57
      %p59 = scmp.ne.s32.totalorder %s51, %s54
      %p60 = scmp.eq.s32.totalorder %s14, 0
      %p61 = por %p59, %p60
      %p62 = scmp.ne.s32.totalorder %s51, %s54
      %p63 = scmp.eq.s32.totalorder %s19, 1
      %p64 = por %p62, %p63
      %p65 = scmp.ne.s32.totalorder %s54, %s55
      %p66 = scmp.eq.s32.totalorder %s19, 0
      %p67 = por %p65, %p66
      %p68 = scmp.ne.s32.totalorder %s54, %s55
      %p69 = scmp.eq.s32.totalorder %s20, 1
      %p70 = por %p68, %p69
      %p72 = scmp.ne.s32.totalorder %s55, %s71
      %p73 = scmp.eq.s32.totalorder %s20, 0
      %p74 = por %p72, %p73
      %s75 = sadd.s32 %s22, %s23
      %p76 = scmp.lt.s32.totalorder %s75, 0
      %s77 = scalar_select %p76, %s75, 0
      %s78 = sadd.s32 %s36, %s32
      %p79 = scmp.lt.s32.totalorder %s78, 0
      %s80 = scalar_select %p79, %s78, 0
      %s81 = ssub.s32 %s21, %s40
      %s82 = ssub.s32 %s77, %s80
      %s83 = sor.u32 %s81, %s82
      %p84 = scmp.eq.s32.totalorder %s83, 0
      %s86 = sadd.s32 %s85, 1
      %s87 = scalar_select %p84, %s85, %s86
      %p90 = pneg %p84
      %p91 = scmp.eq.s32.totalorder %s14, 1
      %p92 = por %p90, %p91
      %p93 = scmp.ne.s32.totalorder %s85, %s88
      %p94 = scmp.eq.s32.totalorder %s14, 0
      %p95 = por %p93, %p94
      %p96 = scmp.ne.s32.totalorder %s85, %s88
      %p97 = scmp.eq.s32.totalorder %s19, 1
      %p98 = por %p96, %p97
      %p99 = scmp.ne.s32.totalorder %s88, %s89
      %p100 = scmp.eq.s32.totalorder %s19, 0
      %p101 = por %p99, %p100
      %p102 = scmp.ne.s32.totalorder %s88, %s89
      %p103 = scmp.eq.s32.totalorder %s20, 1
      %p104 = por %p102, %p103
      %p106 = scmp.ne.s32.totalorder %s89, %s105
      %p107 = scmp.eq.s32.totalorder %s20, 0
      %p108 = por %p106, %p107
      %s110 = sadd.s32 %s109, 1
      %p113 = scmp.eq.s32.totalorder %s14, 1
      %p114 = scmp.ne.s32.totalorder %s109, %s111
      %p115 = scmp.eq.s32.totalorder %s14, 0
      %p116 = por %p114, %p115
      %p117 = scmp.ne.s32.totalorder %s109, %s111
      %p118 = scmp.eq.s32.totalorder %s19, 1
      %p119 = por %p117, %p118
      %p120 = scmp.ne.s32.totalorder %s111, %s112
      %p121 = scmp.eq.s32.totalorder %s19, 0
      %p122 = por %p120, %p121
      %p123 = scmp.ne.s32.totalorder %s111, %s112
      %p124 = scmp.eq.s32.totalorder %s20, 1
      %p125 = por %p123, %p124
      %p127 = scmp.ne.s32.totalorder %s112, %s126
      %p128 = scmp.eq.s32.totalorder %s20, 0
      %p129 = por %p127, %p128
      %s130 = ssub.s32 %s21, %s40
      %s131 = ssub.s32 %s22, %s36
      %s132 = sor.u32 %s130, %s131
      %p133 = scmp.eq.s32.totalorder %s132, 0
      %s135 = sadd.s32 %s134, 1
      %s136 = scalar_select %p133, %s134, %s135
      %p139 = pneg %p133
      %p140 = scmp.eq.s32.totalorder %s14, 1
      %p141 = por %p139, %p140
      %p142 = scmp.ne.s32.totalorder %s134, %s137
      %p143 = scmp.eq.s32.totalorder %s14, 0
      %p144 = por %p142, %p143
      %p145 = scmp.ne.s32.totalorder %s134, %s137
      %p146 = scmp.eq.s32.totalorder %s19, 1
      %p147 = por %p145, %p146
      %p148 = scmp.ne.s32.totalorder %s137, %s138
      %p149 = scmp.eq.s32.totalorder %s19, 0
      %p150 = por %p148, %p149
      %p151 = scmp.ne.s32.totalorder %s137, %s138
      %p152 = scmp.eq.s32.totalorder %s20, 1
      %p153 = por %p151, %p152
      %p155 = scmp.ne.s32.totalorder %s138, %s154
      %p156 = scmp.eq.s32.totalorder %s20, 0
      %p157 = por %p155, %p156
      %s158 = ssub.s32 %s21, %s40
      %s159 = ssub.s32 %s22, %s36
      %s160 = sor.u32 %s158, %s159
      %p161 = scmp.eq.s32.totalorder %s160, 0
      %s163 = sadd.s32 %s162, 1
      %s164 = scalar_select %p161, %s162, %s163
      %p167 = pneg %p161
      %p168 = scmp.eq.s32.totalorder %s14, 1
      %p169 = por %p167, %p168
      %p170 = scmp.ne.s32.totalorder %s162, %s165
      %p171 = scmp.eq.s32.totalorder %s14, 0
      %p172 = por %p170, %p171
      %p173 = scmp.ne.s32.totalorder %s162, %s165
      %p174 = scmp.eq.s32.totalorder %s19, 1
      %p175 = por %p173, %p174
      %p176 = scmp.ne.s32.totalorder %s165, %s166
      %p177 = scmp.eq.s32.totalorder %s19, 0
      %p178 = por %p176, %p177
      %p179 = scmp.ne.s32.totalorder %s165, %s166
      %p180 = scmp.eq.s32.totalorder %s20, 1
      %p181 = por %p179, %p180
      %p183 = scmp.ne.s32.totalorder %s166, %s182
      %p184 = scmp.eq.s32.totalorder %s20, 0
      %p185 = por %p183, %p184
      %p186 = scmp.le.s32.totalorder 1, %s14
      %p187 = scmp.lt.s32.totalorder %s14, 3
      %p188 = pnand %p186, %p187
      %p189 = pneg %p188
      // Predicated region
      $region9: #{tpu_custom_call.1} parent=5 // pred_check
        _
      $region10: #{tpu_custom_call.1} parent=5 // pred_check_branch
        %191 = sbr.rel (%p188) target = $region12
      $region11: #{tpu_custom_call.1} parent=5 // pred_region
        %s192 = ssub.s32 %s14, 1
        // Predicated region
        $region13: #{tpu_custom_call.1} parent=11 // pred_check
          %p193 = pneg %p122
        $region14: #{tpu_custom_call.1} parent=11 // pred_check_branch
          %195 = sbr.rel (%p193) target = $region16
        $region15: #{tpu_custom_call.1} parent=11 // pred_region
          _
        $region16: #{tpu_custom_call.1} parent=11 // pred_fallthru
          _
      $region12: #{tpu_custom_call.1} parent=5 // pred_fallthru
        _
      %p196 = scmp.lt.s32.totalorder %s14, 2
      // Predicated region
      $region17: #{tpu_custom_call.1} parent=5 // pred_check
        %p197 = pneg %p196
      $region18: #{tpu_custom_call.1} parent=5 // pred_check_branch
        %199 = sbr.rel (%p197) target = $region20
      $region19: #{tpu_custom_call.1} parent=5 // pred_region
        // Predicated region
        $region21: #{tpu_custom_call.1} parent=19 // pred_check
          %p200 = pneg %p61
        $region22: #{tpu_custom_call.1} parent=19 // pred_check_branch
          %202 = sbr.rel (%p200) target = $region24
        $region23: #{tpu_custom_call.1} parent=19 // pred_region
          %s203 = sand.u32 %s51, 1
          %s204 = scalar_lea.sflag [#allocation5], %s203
          %s205 = sand.u32 %s51, 1
          %s206 = smul.addr %s205, 8
          %s207 = scalar_lea.vmem [#allocation4], %s206
          %s208 = sadd.s32 %s22, %s23
          %p209 = scmp.lt.s32.totalorder %s208, 0
          %s210 = scalar_select %p209, %s208, 0
          %s212 = ssub.s32 128, 128
          %213 = vsyncadd %s204, %s212
          %s214 = smul.addr %s21, 4
          %s215 = sadd.s32 %s210, %s214
          %s216 = smul.addr %s215, 32
          %s217 = scalar_lea.hbm %s0, %s216
          %s218 = sshll.u32 %s207, 4
          %s219 = int_to_ptr.vmem [resolvable:$true] %s218
          %224 = dma.hbm_to_vmem [thread:$0]  %s217, 128, %s219, %s204, 32, 32, 2
        $region24: #{tpu_custom_call.1} parent=19 // pred_fallthru
          _
        // Predicated region
        $region25: #{tpu_custom_call.1} parent=19 // pred_check
          %p225 = pneg %p95
        $region26: #{tpu_custom_call.1} parent=19 // pred_check_branch
          %227 = sbr.rel (%p225) target = $region28
        $region27: #{tpu_custom_call.1} parent=19 // pred_region
          %s228 = sadd.s32 %s22, %s23
          %p229 = scmp.lt.s32.totalorder %s228, 0
          %s230 = scalar_select %p229, %s228, 0
          %p231 = scmp.lt.s32.totalorder %s21, 1
          %s232 = scalar_select %p231, %s21, 1
          %p233 = scmp.lt.s32.totalorder %s230, 0
          %s234 = scalar_select %p233, %s230, 0
          %s235 = sadd.s32 %s234, %s232
          %s236 = smul.addr %s235, 2
          %s237 = scalar_lea.vmem %s1, %s236
          %s238 = sadd.s32 %s22, %s23
          %p239 = scmp.lt.s32.totalorder %s238, 0
          %s240 = scalar_select %p239, %s238, 0
        $region28: #{tpu_custom_call.1} parent=19 // pred_fallthru
          _
      $region20: #{tpu_custom_call.1} parent=5 // pred_fallthru
        _
      %p241 = scmp.le.s32.totalorder 1, %s14
      %p242 = scmp.lt.s32.totalorder %s14, 3
      %p243 = pnand %p241, %p242
      %p244 = pneg %p243
      // Predicated region
      $region29: #{tpu_custom_call.1} parent=5 // pred_check
        _
      $region30: #{tpu_custom_call.1} parent=5 // pred_check_branch
        %246 = sbr.rel (%p243) target = $region32
      $region31: #{tpu_custom_call.1} parent=5 // pred_region
        %s247 = ssub.s32 %s14, 1
        %s248 = sand.u32 %s54, 1
        %s249 = scalar_lea.sflag [#allocation5], %s248
        %s250 = sand.u32 %s54, 1
        %s251 = smul.addr %s250, 8
        %s252 = scalar_lea.vmem [#allocation4], %s251
        // Predicated region
        $region33: #{tpu_custom_call.1} parent=31 // pred_check
          %p253 = pneg %p67
        $region34: #{tpu_custom_call.1} parent=31 // pred_check_branch
          %255 = sbr.rel (%p253) target = $region36
        $region35: #{tpu_custom_call.1} parent=31 // pred_region
          %256 = dma.done %s249, 128
        $region36: #{tpu_custom_call.1} parent=31 // pred_fallthru
          _
        %s257 = sand.u32 %s54, 1
        %s258 = scalar_lea.sflag [#allocation5], %s257
        %s259 = sand.u32 %s54, 1
        %s260 = smul.addr %s259, 8
        %s261 = scalar_lea.vmem [#allocation4], %s260
        %p262 = pneg %p67
        %p263 = pneg %p64
        %s264 = sadd.s32 %s25, %s26
        %p265 = scmp.lt.s32.totalorder %s264, 0
        %s266 = scalar_select %p265, %s264, 0
        %p267 = scmp.lt.s32.totalorder %s24, 1
        %s268 = scalar_select %p267, %s24, 1
        %p269 = scmp.lt.s32.totalorder %s266, 0
        %s270 = scalar_select %p269, %s266, 0
        %s271 = sadd.s32 %s270, %s268
        %s272 = smul.addr %s271, 2
        %s273 = scalar_lea.vmem %s1, %s272
        %p274 = pneg %p101
        %p275 = pneg %p98
        %p276 = pneg %p122
        %p277 = pneg %p119
        %p278 = pneg %p150
        %p279 = pneg %p147
        %p280 = scmp.lt.s32.totalorder %s24, 1
        %s281 = scalar_select %p280, %s24, 1
        %p282 = scmp.lt.s32.totalorder %s25, 0
        %s283 = scalar_select %p282, %s25, 0
        %s284 = sadd.s32 %s283, %s281
        %s285 = scalar_lea.vmem %s3, %s284
        %p286 = pneg %p178
        %p287 = pneg %p175
        %p288 = scmp.lt.s32.totalorder %s24, 1
        %s289 = scalar_select %p288, %s24, 1
        %p290 = scmp.lt.s32.totalorder %s25, 0
        %s291 = scalar_select %p290, %s25, 0
        %s292 = sadd.s32 %s291, %s289
        %s293 = scalar_lea.vmem %s4, %s292
        %s294 = sadd.s32 %s25, %s26
        %p295 = scmp.lt.s32.totalorder %s294, 0
        %s296 = scalar_select %p295, %s294, 0
        %s297 = sadd.s32 %s25, %s26
        %p298 = scmp.lt.s32.totalorder %s297, 0
        %s299 = scalar_select %p298, %s297, 0
        %p300 = scmp.lt.s32.totalorder %s24, 1
        %s301 = scalar_select %p300, %s24, 1
        %p302 = scmp.lt.s32.totalorder %s299, 0
        %s303 = scalar_select %p302, %s299, 0
        %s304 = sadd.s32 %s303, %s301
        %s305 = smul.addr %s304, 2
        %s306 = scalar_lea.vmem %s1, %s305
        %s307 = sadd.s32 %s25, %s26
        %p308 = scmp.lt.s32.totalorder %s307, 0
        %s309 = scalar_select %p308, %s307, 0
        %p310 = scmp.lt.s32.totalorder %s24, 1
        %s311 = scalar_select %p310, %s24, 1
        %p312 = scmp.lt.s32.totalorder %s25, 0
        %s313 = scalar_select %p312, %s25, 0
        %s314 = sadd.s32 %s313, %s311
        %s315 = scalar_lea.vmem %s3, %s314
        %p316 = scmp.lt.s32.totalorder %s24, 1
        %s317 = scalar_select %p316, %s24, 1
        %p318 = scmp.lt.s32.totalorder %s25, 0
        %s319 = scalar_select %p318, %s25, 0
        %s320 = sadd.s32 %s319, %s317
        %s321 = scalar_lea.vmem %s4, %s320
        %v322 = vld [vmem:[%s252] sm:$0x3]
        %v323 = vld [vmem:[%s252 + $0x2] sm:$0x3]
        %v324 = vld [vmem:[%s252 + $0x4] sm:$0x3]
        %v325 = vld [vmem:[%s252 + $0x6] sm:$0x3]
        %v326 = vld [vmem:[%s306] sm:$0x3]
        %v327 = vld [vmem:[%s2] sm:$0x1]
        %v328 = vld [vmem:[%s2 + $0x1] sm:$0x1]
        %v329 = vld [vmem:[%s2 + $0x2] sm:$0x1]
        %v330 = vld [vmem:[%s2 + $0x3] sm:$0x1]
        %s331 = sadd.s32 %s25, %s26
        %v332 = vlaneseq
        %v333 = vand.u32 %v332, 127
        %v334 = vlaneseq
        %v335 = vshrl.u32 %v334, 7
        %v336 = vmul.u32 %v335, 128
        %v337 = vadd.s32 %v333, %v336
        %s338 = smul.u32 %s331, 256
        %v339 = vstv %s338
        %v340 = vadd.s32 %v339, %v337
        %vm341 = vcmp.lt.s32.totalorder %v340, 256
        %vm342 = vcmask 1041408
        %v343 = vsel %vm342, %v322, -inf
        %v344 = vsel %vm342, %v323, -inf
        %v345 = vsel %vm342, %v324, -inf
        %v346 = vsel %vm342, %v325, -inf
        %v347 = vmax.f32 %v343, %v344
        %v348 = vmax.f32 %v345, %v346
        %v349 = vmax.f32 %v347, %v348
        %vm350 = vcmp.eq.f32.partialorder %v322, %v349
        %vm351 = vcmp.eq.f32.partialorder %v323, %v349
        %vm352 = vcmp.eq.f32.partialorder %v324, %v349
        %vm353 = vcmp.eq.f32.partialorder %v325, %v349
        %v354 = vsel %vm350, 0, 4
        %v355 = vsel %vm351, 1, 4
        %v356 = vsel %vm352, 2, 4
        %v357 = vsel %vm353, 3, 4
        %v358 = vsel %vm342, %v354, 2147483647
        %v359 = vsel %vm342, %v355, 2147483647
        %v360 = vsel %vm342, %v356, 2147483647
        %v361 = vsel %vm342, %v357, 2147483647
        %vm362 = vcmp.lt.s32.totalorder %v358, %v359
        %v363 = vsel %vm362, %v358, %v359
        %vm364 = vcmp.lt.s32.totalorder %v360, %v361
        %v365 = vsel %vm364, %v360, %v361
        %vm366 = vcmp.lt.s32.totalorder %v363, %v365
        %v367 = vsel %vm366, %v363, %v365
        %vm368 = vcmp.eq.s32.totalorder %v367, %v326
        %v369 = vsub.f32 %v322, %v349
        %v370 = vsub.f32 %v323, %v349
        %v371 = vsub.f32 %v324, %v349
        %v372 = vsub.f32 %v325, %v349
        %v373 = vmul.f32 %v369, 1.442695
        %v374 = vpow.pop %v373
        %v375 = vmul.f32 %v370, 1.442695
        %v376 = vpow.pop %v375
        %v377 = vmul.f32 %v371, 1.442695
        %v378 = vpow.pop %v377
        %v379 = vmul.f32 %v372, 1.442695
        %v380 = vpow.pop %v379
        %v381 = vsel %vm342, %v374, 0.0
        %v382 = vsel %vm342, %v376, 0.0
        %v383 = vadd.f32 %v381, %v382
        %v384 = vsel %vm342, %v378, 0.0
        %v385 = vadd.f32 %v383, %v384
        %v386 = vsel %vm342, %v380, 0.0
        %v387 = vadd.f32 %v385, %v386
        %vm388 = vcmp.eq.s32.totalorder %v326, 0
        %vm389 = vcmp.eq.s32.totalorder %v326, 1
        %vm390 = vcmp.eq.s32.totalorder %v326, 2
        %vm391 = vcmp.eq.s32.totalorder %v326, 3
        %v396 = vlaneseq
        %v397 = vshrl.u32 %v396, 7
        %v398 = vsub.s32 0, %v397
        %v399 = vrot.slane %v327, %v398
        %v400 = vlaneseq
        %v401 = vshrl.u32 %v400, 7
        %v402 = vsub.s32 0, %v401
        %v403 = vrot.slane %v328, %v402
        %v404 = vlaneseq
        %v405 = vshrl.u32 %v404, 7
        %v406 = vsub.s32 0, %v405
        %v407 = vrot.slane %v329, %v406
        %v408 = vlaneseq
        %v409 = vshrl.u32 %v408, 7
        %v410 = vsub.s32 0, %v409
        %v411 = vrot.slane %v330, %v410
        %412 = vset.pattern.permute.xlu0 0
        %413 = vperm.xlu0 %412, %v399
        %v414 = vpop.permute.xlu0 %413
        %416 = vset.pattern.permute.xlu0 0
        %417 = vperm.xlu0 %416, %v403
        %v418 = vpop.permute.xlu0 %417
        %420 = vset.pattern.permute.xlu0 0
        %421 = vperm.xlu0 %420, %v407
        %v422 = vpop.permute.xlu0 %421
        %424 = vset.pattern.permute.xlu0 0
        %425 = vperm.xlu0 %424, %v411
        %v426 = vpop.permute.xlu0 %425
        %v428 = vsel %vm388, %v414, 0.0
        %v429 = vsel %vm389, %v418, 0.0
        %v430 = vsel %vm390, %v422, 0.0
        %v431 = vsel %vm391, %v426, 0.0
        %v432 = vsel %vm342, %v428, 0.0
        %v433 = vsel %vm342, %v429, 0.0
        %v434 = vadd.f32 %v432, %v433
        %v435 = vsel %vm342, %v430, 0.0
        %v436 = vadd.f32 %v434, %v435
        %v437 = vsel %vm342, %v431, 0.0
        %v438 = vadd.f32 %v436, %v437
        %v439 = vsel %vm388, %v322, 0.0
        %v440 = vsel %vm389, %v323, 0.0
        %v441 = vsel %vm390, %v324, 0.0
        %v442 = vsel %vm391, %v325, 0.0
        %v443 = vsel %vm342, %v439, 0.0
        %v444 = vsel %vm342, %v440, 0.0
        %v445 = vadd.f32 %v443, %v444
        %v446 = vsel %vm342, %v441, 0.0
        %v447 = vadd.f32 %v445, %v446
        %v448 = vsel %vm342, %v442, 0.0
        %v449 = vadd.f32 %v447, %v448
        %v450 = vsub.f32 %v449, %v349
        %v451 = vlog2.pop %v387
        %v452 = vmul.f32 %v451, 0.6931472
        %v453 = vsub.f32 %v450, %v452
        %v454 = vsel %vm368, %v453, -1.3862944
        %v455 = vmul.f32 %v438, %v454
        %v456 = vsel %vm341, %v455, 0.0
        %v457 = vsel %vm341, %v438, 0.0
        %p458 = scmp.eq.s32.totalorder %s26, 0
        // Predicated region
        $region37: #{tpu_custom_call.1} parent=31 // pred_check
          %p459 = pneg %p458
        $region38: #{tpu_custom_call.1} parent=31 // pred_check_branch
          %461 = sbr.rel (%p459) target = $region40
        $region39: #{tpu_custom_call.1} parent=31 // pred_region
          %462 = vst [vmem:[#allocation2] sm:$0x3] 0.0
          %463 = vst [vmem:[#allocation3] sm:$0x3] 0.0
        $region40: #{tpu_custom_call.1} parent=31 // pred_fallthru
          _
        %v464 = vld [vmem:[#allocation2] sm:$0x3]
        %v465 = vadd.f32 %v464, %v456
        %466 = vst [vmem:[#allocation2] sm:$0x3] %v465
        %v467 = vld [vmem:[#allocation3] sm:$0x3]
        %v468 = vadd.f32 %v467, %v457
        %469 = vst [vmem:[#allocation3] sm:$0x3] %v468
        // Predicated region
        $region41: #{tpu_custom_call.1} parent=31 // pred_check
          %p470 = pneg %p458
        $region42: #{tpu_custom_call.1} parent=31 // pred_check_branch
          %472 = sbr.rel (%p470) target = $region44
        $region43: #{tpu_custom_call.1} parent=31 // pred_region
          %v473 = vld [vmem:[#allocation2] sm:$0x3]
          %v474 = vld [vmem:[#allocation3] sm:$0x3]
          %v475 = vsel %vm342, %v473, 0.0
          %476 = vadd.xlane.f32.xlu0 %v475
          %v477 = vpop.xlane.xlu0 %476
          %v478 = vrot.slane %v477, 4
          %v479 = vadd.f32 %v477, %v478
          %v480 = vrot.slane %v479, 2
          %v481 = vadd.f32 %v479, %v480
          %v482 = vrot.slane %v481, 1
          %v483 = vadd.f32 %v481, %v482
          %v484 = vsub.f32 0.0, %v483
          %vm485 = vcmask 0
          %486 = vst.msk [vmem:[%s315] sm:$0x1] %vm485, %v484
          %v487 = vsel %vm342, %v474, 0.0
          %488 = vadd.xlane.f32.xlu0 %v487
          %v489 = vpop.xlane.xlu0 %488
          %v490 = vrot.slane %v489, 4
          %v491 = vadd.f32 %v489, %v490
          %v492 = vrot.slane %v491, 2
          %v493 = vadd.f32 %v491, %v492
          %v494 = vrot.slane %v493, 1
          %v495 = vadd.f32 %v493, %v494
          %496 = vst.msk [vmem:[%s321] sm:$0x1] %vm485, %v495
        $region44: #{tpu_custom_call.1} parent=31 // pred_fallthru
          _
        %p497 = scmp.lt.s32.totalorder %s24, 1
        %s498 = scalar_select %p497, %s24, 1
        %p499 = scmp.lt.s32.totalorder %s25, 0
        %s500 = scalar_select %p499, %s25, 0
        %s501 = sadd.s32 %s500, %s498
        %s502 = scalar_lea.vmem %s3, %s501
        %p503 = scmp.lt.s32.totalorder %s24, 1
        %s504 = scalar_select %p503, %s24, 1
        %p505 = scmp.lt.s32.totalorder %s25, 0
        %s506 = scalar_select %p505, %s25, 0
        %s507 = sadd.s32 %s506, %s504
        %s508 = scalar_lea.vmem %s4, %s507
        // Predicated region
        $region45: #{tpu_custom_call.1} parent=31 // pred_check
          %p509 = pneg %p147
        $region46: #{tpu_custom_call.1} parent=31 // pred_check_branch
          %511 = sbr.rel (%p509) target = $region48
        $region47: #{tpu_custom_call.1} parent=31 // pred_region
          _
        $region48: #{tpu_custom_call.1} parent=31 // pred_fallthru
          _
        // Predicated region
        $region49: #{tpu_custom_call.1} parent=31 // pred_check
          %p512 = pneg %p175
        $region50: #{tpu_custom_call.1} parent=31 // pred_check_branch
          %514 = sbr.rel (%p512) target = $region52
        $region51: #{tpu_custom_call.1} parent=31 // pred_region
          _
        $region52: #{tpu_custom_call.1} parent=31 // pred_fallthru
          _
      $region32: #{tpu_custom_call.1} parent=5 // pred_fallthru
        _
      %p515 = scmp.le.s32.totalorder 2, %s14
      // Predicated region
      $region53: #{tpu_custom_call.1} parent=5 // pred_check
        %p516 = pneg %p515
      $region54: #{tpu_custom_call.1} parent=5 // pred_check_branch
        %518 = sbr.rel (%p516) target = $region56
      $region55: #{tpu_custom_call.1} parent=5 // pred_region
        %s519 = ssub.s32 %s14, 2
        // Predicated region
        $region57: #{tpu_custom_call.1} parent=55 // pred_check
          %p520 = pneg %p153
        $region58: #{tpu_custom_call.1} parent=55 // pred_check_branch
          %522 = sbr.rel (%p520) target = $region60
        $region59: #{tpu_custom_call.1} parent=55 // pred_region
          %p523 = scmp.lt.s32.totalorder %s27, 1
          %s524 = scalar_select %p523, %s27, 1
          %p525 = scmp.lt.s32.totalorder %s28, 0
          %s526 = scalar_select %p525, %s28, 0
          %s527 = sadd.s32 %s526, %s524
          %s528 = scalar_lea.vmem %s3, %s527
        $region60: #{tpu_custom_call.1} parent=55 // pred_fallthru
          _
        // Predicated region
        $region61: #{tpu_custom_call.1} parent=55 // pred_check
          %p529 = pneg %p181
        $region62: #{tpu_custom_call.1} parent=55 // pred_check_branch
          %531 = sbr.rel (%p529) target = $region64
        $region63: #{tpu_custom_call.1} parent=55 // pred_region
          %p532 = scmp.lt.s32.totalorder %s27, 1
          %s533 = scalar_select %p532, %s27, 1
          %p534 = scmp.lt.s32.totalorder %s28, 0
          %s535 = scalar_select %p534, %s28, 0
          %s536 = sadd.s32 %s535, %s533
          %s537 = scalar_lea.vmem %s4, %s536
        $region64: #{tpu_custom_call.1} parent=55 // pred_fallthru
          _
      $region56: #{tpu_custom_call.1} parent=5 // pred_fallthru
        _
    $region6: #{tpu_custom_call.1} parent=1 // loop_footer
      %s18 = sadd.s32 1, %s14
    $region7: #{tpu_custom_call.1} parent=1 // loop_footer_branch
      %13 = sbr.rel target = $region3
    $region8: #{tpu_custom_call.1} parent=1 // loop_exit
      _
    %538 = vsyncpa [#allocation5], 1
    %s539 = scalar_lea.sflag [#allocation5], 1
    %540 = vsyncpa %s539, 1

</llo_original>
